<compile_context>
chip_gen: v6e
topology: v6e:2x2x1
jax: 0.10.0
libtpu: 0.0.40
codegen_flags: <defaults>
</compile_context>

<pallas_src>
import jax
import jax.numpy as jnp
from jax.experimental import pallas as pl
from jax.experimental.pallas import tpu as pltpu


_LANE = 128                       # lane width (last dim of every dense tile)
_SMALL_N = 8192                   # below this, plain XLA beats kernel launch cost
_TILE_BUDGET = 24 * 1024 * 1024   # bytes of double-buffered blocks per grid step
_VMEM_LIMIT = 32 * 1024 * 1024    # explicit scoped-VMEM limit (headroom on v7x 64 MiB)
_MIN_GRID_STEPS = 8               # keep pipelining + both v7x TCs busy


def _sublane_multiple(dtype):
    # Native sublane tiling: 8 rows for 32-bit, 16 for 16-bit, 32 for 8-bit.
    return 8 * (4 // jnp.dtype(dtype).itemsize)


def _round_up(x, m):
    return ((x + m - 1) // m) * m


def _pick_row_tile(num_rows, num_views, dtype):
    """Rows per block: as large as the VMEM budget allows, but capped so the
    1-D grid keeps >= _MIN_GRID_STEPS steps (pipelining + v7x megacore)."""
    sub = _sublane_multiple(dtype)
    item = jnp.dtype(dtype).itemsize
    # Double-buffered: V input blocks + 1 output block, all (tr, 128), no
    # sublane padding since tr is a multiple of the native sublane count.
    bytes_per_row = 2 * (num_views + 1) * _LANE * item
    tr_budget = max(sub, (_TILE_BUDGET // bytes_per_row) // sub * sub)
    tr_steps = max(sub, _round_up(pl.cdiv(num_rows, _MIN_GRID_STEPS), sub))
    return min(tr_budget, tr_steps)


def _stacked_kernel(w_ref, views_ref, out_ref):
    # w_ref:     (V,)        f32 SMEM  -- softmax'd attention weights (scalars)
    # views_ref: (V, tr, C)  VMEM      -- dense (8,128)-aligned tile per view
    # out_ref:   (tr, C)     VMEM      -- fused tile
    num_views = views_ref.shape[0]
    acc = w_ref[0] * views_ref[0].astype(jnp.float32)
    for i in range(1, num_views):
        acc = acc + w_ref[i] * views_ref[i].astype(jnp.float32)
    out_ref[...] = acc.astype(out_ref.dtype)


def _make_unstacked_kernel(num_views):
    # Same MAC, but each view arrives as its own (tr, C) VMEM ref (no stack).
    def kernel(w_ref, *refs):
        view_refs, out_ref = refs[:num_views], refs[num_views]
        acc = w_ref[0] * view_refs[0][...].astype(jnp.float32)
        for i in range(1, num_views):
            acc = acc + w_ref[i] * view_refs[i][...].astype(jnp.float32)
        out_ref[...] = acc.astype(out_ref.dtype)

    return kernel


def fusion_layer(attention_weights, view_reps):
    """attention_weights: (V,); view_reps: (V, B, H) array or list of V (B, H)
    arrays -> fused representation (B, H)."""
    is_list = isinstance(view_reps, (list, tuple))
    if is_list:
        views = [jnp.asarray(v) for v in view_reps]
        num_views = len(views)
        out_shape = views[0].shape
        dtype = views[0].dtype
    else:
        view_reps = jnp.asarray(view_reps)
        num_views = view_reps.shape[0]
        out_shape = view_reps.shape[1:]
        dtype = view_reps.dtype

    n = 1
    for d in out_shape:
        n *= d

    # Softmax over V (a handful of scalars) once, as a plain XLA op.
    w = jax.nn.softmax(attention_weights.astype(jnp.float32))

    # Small problems: fixed pallas_call launch/DMA overhead dominates -> XLA.
    if n < _SMALL_N:
        if is_list:
            stacked = jnp.stack([v.reshape(n) for v in views], axis=0)
        else:
            stacked = view_reps.reshape(num_views, n)
        fused = jnp.einsum("v,vn->n", w, stacked.astype(jnp.float32))
        return fused.astype(dtype).reshape(out_shape)

    # Dense (8,128) layout: flatten, pad to a multiple of 128 lanes (only if
    # needed) and view as (rows, 128) so every vreg / store is full-width.
    n_pad = _round_up(n, _LANE)
    rows = n_pad // _LANE
    tr = _pick_row_tile(rows, num_views, dtype)
    grid = (pl.cdiv(rows, tr),)

    def to_rows(flat):
        if n_pad != n:
            flat = jnp.pad(flat, (0, n_pad - n))
        return flat.reshape(rows, _LANE)

    w_spec = pl.BlockSpec(memory_space=pltpu.MemorySpace.SMEM)
    tile_spec = pl.BlockSpec((tr, _LANE), lambda j: (j, 0))
    params = pltpu.CompilerParams(
        dimension_semantics=("parallel",),
        vmem_limit_bytes=_VMEM_LIMIT,
    )

    if is_list:
        # V separate inputs: avoid the jnp.stack HBM copy; the kernel reads the
        # original view buffers directly.
        view_rows = [to_rows(v.reshape(n)) for v in views]
        out2d = pl.pallas_call(
            _make_unstacked_kernel(num_views),
            out_shape=jax.ShapeDtypeStruct((rows, _LANE), dtype),
            grid=grid,
            in_specs=[w_spec] + [tile_spec] * num_views,
            out_specs=tile_spec,
            compiler_params=params,
        )(w, *view_rows)
    else:
        v2d = view_reps.reshape(num_views, n)
        if n_pad != n:
            v2d = jnp.pad(v2d, ((0, 0), (0, n_pad - n)))
        views3d = v2d.reshape(num_views, rows, _LANE)
        out2d = pl.pallas_call(
            _stacked_kernel,
            out_shape=jax.ShapeDtypeStruct((rows, _LANE), dtype),
            grid=grid,
            in_specs=[
                w_spec,
                pl.BlockSpec((num_views, tr, _LANE), lambda j: (0, j, 0)),
            ],
            out_specs=tile_spec,
            compiler_params=params,
        )(w, views3d)

    return out2d.reshape(n_pad)[:n].reshape(out_shape)


if __name__ == "__main__":
    key = jax.random.PRNGKey(0)
    k_w, k_small, k_big, k_list = jax.random.split(key, 4)

    num_views = 4
    # nn.init.uniform_(attention_weights): U[0, 1), deterministic here.
    attention_weights = jax.random.uniform(k_w, (num_views,), dtype=jnp.float32)
    w_norm = jax.nn.softmax(attention_weights)

    def reference(views_stacked):
        fused = jnp.zeros(views_stacked.shape[1:], dtype=jnp.float32)
        for i in range(num_views):
            fused = fused + w_norm[i] * views_stacked[i].astype(jnp.float32)
        return fused

    # 1) Module-sized input (batch=2, hidden=32): small-N fused-XLA path.
    small = jax.random.normal(k_small, (num_views, 2, 32), dtype=jnp.float32)
    out_small = jax.block_until_ready(fusion_layer(attention_weights, small))
    assert out_small.shape == (2, 32)
    assert jnp.allclose(out_small, reference(small), atol=1e-5, rtol=1e-5)

    # 2) Larger stacked input: exercises the Pallas kernel (dense (8,128)
    #    tiles, multi-step pipelined grid).
    big = jax.random.normal(k_big, (num_views, 64, 256), dtype=jnp.float32)
    out_big = jax.block_until_ready(fusion_layer(attention_weights, big))
    assert out_big.shape == (64, 256)
    assert jnp.allclose(out_big, reference(big), atol=1e-5, rtol=1e-5)

    # 3) List-of-views input with a ragged (non-multiple-of-128) extent:
    #    exercises the stack-free per-view kernel + padded partial last tile.
    views_list = [
        jax.random.normal(jax.random.fold_in(k_list, i), (3, 3333), dtype=jnp.float32)
        for i in range(num_views)
    ]
    out_list = jax.block_until_ready(fusion_layer(attention_weights, views_list))
    assert out_list.shape == (3, 3333)
    assert jnp.allclose(
        out_list, reference(jnp.stack(views_list, axis=0)), atol=1e-5, rtol=1e-5
    )

    print("KERNEL_OK")
</pallas_src>

<mosaic_0001>
module attributes {stable_mosaic.version = 11 : i64} {
  func.func @_stacked_kernel(%arg0: i32, %arg1: memref<4xf32, #tpu.memory_space<smem>>, %arg2: memref<4x16x128xf32, #tpu.memory_space<vmem>>, %arg3: memref<16x128xf32, #tpu.memory_space<vmem>>) attributes {dimension_semantics = [#tpu.dimension_semantics<parallel>], iteration_bounds = array<i64: 8>, scalar_prefetch = 0 : i64, scratch_operands = 0 : i64, tpu.core_type = #tpu.core_type<tc>, window_params = [{transform_indices = @transform_0, window_bounds = array<i64: 4>}, {transform_indices = @transform_1, window_bounds = array<i64: 4, 16, 128>}, {transform_indices = @transform_2, window_bounds = array<i64: 16, 128>}]} {
    %c0 = arith.constant 0 : index
    %0 = memref.load %arg1[%c0] : memref<4xf32, #tpu.memory_space<smem>>
    %c0_0 = arith.constant 0 : index
    %c0_1 = arith.constant 0 : index
    %c0_2 = arith.constant 0 : index
    %1 = vector.load %arg2[%c0_0, %c0_1, %c0_2] : memref<4x16x128xf32, #tpu.memory_space<vmem>>, vector<1x16x128xf32>
    %2 = vector.shape_cast %1 : vector<1x16x128xf32> to vector<16x128xf32>
    %3 = vector.broadcast %0 : f32 to vector<16x128xf32>
    %4 = arith.mulf %3, %2 : vector<16x128xf32>
    %c1 = arith.constant 1 : index
    %5 = memref.load %arg1[%c1] : memref<4xf32, #tpu.memory_space<smem>>
    %c1_3 = arith.constant 1 : index
    %c0_4 = arith.constant 0 : index
    %c0_5 = arith.constant 0 : index
    %6 = vector.load %arg2[%c1_3, %c0_4, %c0_5] : memref<4x16x128xf32, #tpu.memory_space<vmem>>, vector<1x16x128xf32>
    %7 = vector.shape_cast %6 : vector<1x16x128xf32> to vector<16x128xf32>
    %8 = vector.broadcast %5 : f32 to vector<16x128xf32>
    %9 = arith.mulf %8, %7 : vector<16x128xf32>
    %10 = arith.addf %4, %9 : vector<16x128xf32>
    %c2 = arith.constant 2 : index
    %11 = memref.load %arg1[%c2] : memref<4xf32, #tpu.memory_space<smem>>
    %c2_6 = arith.constant 2 : index
    %c0_7 = arith.constant 0 : index
    %c0_8 = arith.constant 0 : index
    %12 = vector.load %arg2[%c2_6, %c0_7, %c0_8] : memref<4x16x128xf32, #tpu.memory_space<vmem>>, vector<1x16x128xf32>
    %13 = vector.shape_cast %12 : vector<1x16x128xf32> to vector<16x128xf32>
    %14 = vector.broadcast %11 : f32 to vector<16x128xf32>
    %15 = arith.mulf %14, %13 : vector<16x128xf32>
    %16 = arith.addf %10, %15 : vector<16x128xf32>
    %c3 = arith.constant 3 : index
    %17 = memref.load %arg1[%c3] : memref<4xf32, #tpu.memory_space<smem>>
    %c3_9 = arith.constant 3 : index
    %c0_10 = arith.constant 0 : index
    %c0_11 = arith.constant 0 : index
    %18 = vector.load %arg2[%c3_9, %c0_10, %c0_11] : memref<4x16x128xf32, #tpu.memory_space<vmem>>, vector<1x16x128xf32>
    %19 = vector.shape_cast %18 : vector<1x16x128xf32> to vector<16x128xf32>
    %20 = vector.broadcast %17 : f32 to vector<16x128xf32>
    %21 = arith.mulf %20, %19 : vector<16x128xf32>
    %22 = arith.addf %16, %21 : vector<16x128xf32>
    %c0_12 = arith.constant 0 : index
    %c0_13 = arith.constant 0 : index
    %23 = vector.load %arg3[%c0_12, %c0_13] : memref<16x128xf32, #tpu.memory_space<vmem>>, vector<16x128xf32>
    tpu.vector_store %arg3[%c0_12, %c0_13], %22 {strides = array<i32>} : memref<16x128xf32, #tpu.memory_space<vmem>>, vector<16x128xf32>,
    return
  }
  func.func @transform_0(%arg0: i32) -> i32 {
    %c0_i32 = arith.constant 0 : i32
    %c0_i32_0 = arith.constant 0 : i32
    return %c0_i32 : i32
  }
  func.func @transform_1(%arg0: i32) -> (i32, i32, i32) {
    %c0_i32 = arith.constant 0 : i32
    %c0_i32_0 = arith.constant 0 : i32
    %c0_i32_1 = arith.constant 0 : i32
    return %c0_i32, %arg0, %c0_i32_0 : i32, i32, i32
  }
  func.func @transform_2(%arg0: i32) -> (i32, i32) {
    %c0_i32 = arith.constant 0 : i32
    %c0_i32_0 = arith.constant 0 : i32
    return %arg0, %c0_i32 : i32, i32
  }
}

</mosaic_0001>

<llo_original>
// kernel: tpu_custom_call.1
$region0: #{tpu_custom_call.1}
  #allocation0 [shape = 'u32[]', space=smem, size = 0x4, offset = 0x4, fixed_abs, tag = 'smem constant byte address 0x4 - core index']
  #allocation1 [shape = 'u32[144,128]{1,0:T(1,128)}', space=vmem, size = 0x12000, scoped, tag = 'internal scratch']
  #allocation8 [shape = 's32[]', space=sflag, size = 0x4, offset = 0, fixed_abs, tag = 'sflag constant byte address 0x0 - dummy sync flag']
  %s0 = inlined_call_operand.hbm [shape: f32[4], index: 0, kind: input, shape index: {}]
  %s1 = inlined_call_operand.hbm [shape: f32[4,128,128], index: 1, kind: input, shape index: {}]
  %s2 = inlined_call_operand.hbm [shape: f32[128,128], index: 2, kind: output, shape index: {}]
  %s3 = sld [smem:[#allocation0]]
  $region49: #{tpu_custom_call.1} parent=0
    _
  %s5 = ssub.s32 1, %s3
  %s6 = scalar_select 0, %s5, %s3
  $region1: #{tpu_custom_call.1} parent=0
    #allocation2 [shape = 'u8[512]{0}', space=smem, size = 0x200, scoped, tag = 'input window, operand 0, single buffered']
    #allocation3 [shape = 's32[2]{0}', space=sflag, size = 0x8, scoped, tag = 'scoped memory for tpu_custom_call.1']
    #allocation4 [shape = 's32[2]{0}', space=sflag, size = 0x8, scoped, tag = 'scoped memory for tpu_custom_call.1']
    #allocation5 [shape = 's32[2]{0}', space=sflag, size = 0x8, scoped, tag = 'scoped memory for tpu_custom_call.1']
    #allocation6 [shape = 'u8[65536]{0}', space=vmem, size = 0x10000, scoped, tag = 'input window, operand 1']
    #allocation7 [shape = 'u8[16384]{0}', space=vmem, size = 0x4000, scoped, tag = 'output window, operand 0']
    %7 = vsyncpa [#allocation5], 0
    %8 = vsyncpa [#allocation3], 0
    %s9 = scalar_lea.sflag [#allocation3], 1
    %10 = vsyncpa %s9, 0
    %11 = vsyncpa [#allocation4], 0
    %s12 = scalar_lea.sflag [#allocation4], 1
    %13 = vsyncpa %s12, 0
    loop: start=0, step=1, limit=10
    $region2: #{tpu_custom_call.1} parent=1 // loop_pre_header
      _
    $region3: #{tpu_custom_call.1} parent=1 // loop_header
      %s15 = sphi 0, %s19
      %p16 = scmp.ge.s32.totalorder %s15, 10
      %s23 = sphi 0, %s23
      %s25 = sphi 0, %s23
      %s26 = sphi 0, %s25
      %s40 = sphi 0, %s26
      %s46 = sphi 0, %s48
      %s49 = sphi 0, %s46
      %s50 = sphi 0, %s49
      %s66 = sphi 0, %s50
      %s72 = sphi 0, %s74
      %s75 = sphi 0, %s72
      %s76 = sphi 0, %s75
      %s92 = sphi 0, %s76
    $region4: #{tpu_custom_call.1} parent=1 // loop_header_branch
      %18 = sbr.rel (%p16) target = $region8
    $region5: #{tpu_custom_call.1} parent=1 // loop_body
      %s20 = ssub.s32 %s15, 1
      %s21 = ssub.s32 %s15, 2
      %s22 = sadd.s32 %s15, 1
      %s24 = sadd.s32 %s23, 1
      %p27 = scmp.eq.s32.totalorder %s15, 7
      %p28 = scmp.ne.s32.totalorder %s23, %s25
      %p29 = scmp.eq.s32.totalorder %s15, 0
      %p30 = por %p28, %p29
      %p31 = scmp.ne.s32.totalorder %s23, %s25
      %p32 = scmp.eq.s32.totalorder %s20, 7
      %p33 = por %p31, %p32
      %p34 = scmp.ne.s32.totalorder %s25, %s26
      %p35 = scmp.eq.s32.totalorder %s20, 0
      %p36 = por %p34, %p35
      %p37 = scmp.ne.s32.totalorder %s25, %s26
      %p38 = scmp.eq.s32.totalorder %s21, 7
      %p39 = por %p37, %p38
      %p41 = scmp.ne.s32.totalorder %s26, %s40
      %p42 = scmp.eq.s32.totalorder %s21, 0
      %p43 = por %p41, %p42
      %s44 = ssub.s32 %s15, %s22
      %p45 = scmp.eq.s32.totalorder %s44, 0
      %s47 = sadd.s32 %s46, 1
      %s48 = scalar_select %p45, %s46, %s47
      %p51 = pneg %p45
      %p52 = scmp.eq.s32.totalorder %s15, 7
      %p53 = por %p51, %p52
      %p54 = scmp.ne.s32.totalorder %s46, %s49
      %p55 = scmp.eq.s32.totalorder %s15, 0
      %p56 = por %p54, %p55
      %p57 = scmp.ne.s32.totalorder %s46, %s49
      %p58 = scmp.eq.s32.totalorder %s20, 7
      %p59 = por %p57, %p58
      %p60 = scmp.ne.s32.totalorder %s49, %s50
      %p61 = scmp.eq.s32.totalorder %s20, 0
      %p62 = por %p60, %p61
      %p63 = scmp.ne.s32.totalorder %s49, %s50
      %p64 = scmp.eq.s32.totalorder %s21, 7
      %p65 = por %p63, %p64
      %p67 = scmp.ne.s32.totalorder %s50, %s66
      %p68 = scmp.eq.s32.totalorder %s21, 0
      %p69 = por %p67, %p68
      %s70 = ssub.s32 %s15, %s22
      %p71 = scmp.eq.s32.totalorder %s70, 0
      %s73 = sadd.s32 %s72, 1
      %s74 = scalar_select %p71, %s72, %s73
      %p77 = pneg %p71
      %p78 = scmp.eq.s32.totalorder %s15, 7
      %p79 = por %p77, %p78
      %p80 = scmp.ne.s32.totalorder %s72, %s75
      %p81 = scmp.eq.s32.totalorder %s15, 0
      %p82 = por %p80, %p81
      %p83 = scmp.ne.s32.totalorder %s72, %s75
      %p84 = scmp.eq.s32.totalorder %s20, 7
      %p85 = por %p83, %p84
      %p86 = scmp.ne.s32.totalorder %s75, %s76
      %p87 = scmp.eq.s32.totalorder %s20, 0
      %p88 = por %p86, %p87
      %p89 = scmp.ne.s32.totalorder %s75, %s76
      %p90 = scmp.eq.s32.totalorder %s21, 7
      %p91 = por %p89, %p90
      %p93 = scmp.ne.s32.totalorder %s76, %s92
      %p94 = scmp.eq.s32.totalorder %s21, 0
      %p95 = por %p93, %p94
      %p96 = scmp.le.s32.totalorder 1, %s15
      %p97 = scmp.lt.s32.totalorder %s15, 9
      %p98 = pnand %p96, %p97
      %p99 = pneg %p98
      // Predicated region
      $region9: #{tpu_custom_call.1} parent=5 // pred_check
        _
      $region10: #{tpu_custom_call.1} parent=5 // pred_check_branch
        %101 = sbr.rel (%p98) target = $region12
      $region11: #{tpu_custom_call.1} parent=5 // pred_region
        %s102 = ssub.s32 %s15, 1
        // Predicated region
        $region13: #{tpu_custom_call.1} parent=11 // pred_check
          %p103 = pneg %p36
        $region14: #{tpu_custom_call.1} parent=11 // pred_check_branch
          %105 = sbr.rel (%p103) target = $region16
        $region15: #{tpu_custom_call.1} parent=11 // pred_region
          %s107 = ssub.s32 16, 16
          %108 = vsyncadd [#allocation5], %s107
          %111 = dma.hbm_to_smem %s0, 16, [#allocation2], [#allocation5]
        $region16: #{tpu_custom_call.1} parent=11 // pred_fallthru
          _
      $region12: #{tpu_custom_call.1} parent=5 // pred_fallthru
        _
      %p112 = scmp.lt.s32.totalorder %s15, 8
      // Predicated region
      $region17: #{tpu_custom_call.1} parent=5 // pred_check
        %p113 = pneg %p112
      $region18: #{tpu_custom_call.1} parent=5 // pred_check_branch
        %115 = sbr.rel (%p113) target = $region20
      $region19: #{tpu_custom_call.1} parent=5 // pred_region
        // Predicated region
        $region21: #{tpu_custom_call.1} parent=19 // pred_check
          %p116 = pneg %p56
        $region22: #{tpu_custom_call.1} parent=19 // pred_check_branch
          %118 = sbr.rel (%p116) target = $region24
        $region23: #{tpu_custom_call.1} parent=19 // pred_region
          #allocation9 [shape = 'u32[6]{0}', space=smem, size = 0x18, scoped, tag = 'DMA stride descriptor']
          %s119 = sand.u32 %s46, 1
          %s120 = scalar_lea.sflag [#allocation3], %s119
          %s121 = sand.u32 %s46, 1
          %s122 = smul.addr %s121, 64
          %s123 = scalar_lea.vmem [#allocation6], %s122
          %s124 = smul.u32 2, %s15
          %s126 = ssub.s32 1024, 1024
          %127 = vsyncadd %s120, %s126
          %s128 = smul.addr %s124, 128
          %s129 = scalar_lea.hbm %s1, %s128
          %s131 = sshll.u32 1, 14
          %s132 = sxor.u32 4294967295, %s131
          %s134 = sld [smem:[#allocation0]]
          %s135 = sadd.s32 2, %s134
          %s137 = sshll.u32 7, 26
          %s138 = sxor.u32 4294967295, %s137
          %s139 = sand.u32 0, %s138
          %s140 = sshll.u32 %s135, 26
          %s141 = sor.u32 %s139, %s140
          %s142 = sshll.u32 %s123, 4
          %s143 = int_to_ptr.vmem [resolvable:$true] %s142
          %149 = sst [smem:[#allocation9]] 2048
          %s150 = scalar_lea.smem [#allocation9], 1
          %151 = sst [smem:[%s150]] 256
          %s152 = scalar_lea.smem [#allocation9], 2
          %153 = sst [smem:[%s152]] 2
          %s154 = scalar_lea.smem [#allocation9], 3
          %155 = sst [smem:[%s154]] 128
          %s156 = scalar_lea.smem [#allocation9], 4
          %157 = sst [smem:[%s156]] 128
          %s158 = scalar_lea.smem [#allocation9], 5
          %159 = sst [smem:[%s158]] 8
          %161 = dma.general %s129, 1024, %s143, %s120, 131072, [#allocation9], %s141, 0
        $region24: #{tpu_custom_call.1} parent=19 // pred_fallthru
          _
      $region20: #{tpu_custom_call.1} parent=5 // pred_fallthru
        _
      %p162 = scmp.le.s32.totalorder 1, %s15
      %p163 = scmp.lt.s32.totalorder %s15, 9
      %p164 = pnand %p162, %p163
      %p165 = pneg %p164
      // Predicated region
      $region25: #{tpu_custom_call.1} parent=5 // pred_check
        _
      $region26: #{tpu_custom_call.1} parent=5 // pred_check_branch
        %167 = sbr.rel (%p164) target = $region28
      $region27: #{tpu_custom_call.1} parent=5 // pred_region
        %s168 = ssub.s32 %s15, 1
        // Predicated region
        $region29: #{tpu_custom_call.1} parent=27 // pred_check
          %p169 = pneg %p36
        $region30: #{tpu_custom_call.1} parent=27 // pred_check_branch
          %171 = sbr.rel (%p169) target = $region32
        $region31: #{tpu_custom_call.1} parent=27 // pred_region
          %172 = dma.done [#allocation5], 16
        $region32: #{tpu_custom_call.1} parent=27 // pred_fallthru
          _
        %s173 = sand.u32 %s49, 1
        %s174 = scalar_lea.sflag [#allocation3], %s173
        %s175 = sand.u32 %s49, 1
        %s176 = smul.addr %s175, 64
        %s177 = scalar_lea.vmem [#allocation6], %s176
        // Predicated region
        $region33: #{tpu_custom_call.1} parent=27 // pred_check
          %p178 = pneg %p62
        $region34: #{tpu_custom_call.1} parent=27 // pred_check_branch
          %180 = sbr.rel (%p178) target = $region36
        $region35: #{tpu_custom_call.1} parent=27 // pred_region
          %181 = dma.done %s174, 1024
        $region36: #{tpu_custom_call.1} parent=27 // pred_fallthru
          _
        %182 = sfence
        %p183 = pneg %p36
        %p184 = pneg %p33
        %s185 = sand.u32 %s49, 1
        %s186 = scalar_lea.sflag [#allocation3], %s185
        %s187 = sand.u32 %s49, 1
        %s188 = smul.addr %s187, 64
        %s189 = scalar_lea.vmem [#allocation6], %s188
        %p190 = pneg %p62
        %p191 = pneg %p59
        %p192 = pneg %p88
        %p193 = pneg %p85
        %s194 = sand.u32 %s75, 1
        %s195 = scalar_lea.sflag [#allocation4], %s194
        %s196 = sand.u32 %s75, 1
        %s197 = smul.addr %s196, 16
        %s198 = scalar_lea.vmem [#allocation7], %s197
        %s199 = smul.u32 2, %s20
        %s200 = smul.u32 2, %s20
        %s201 = sld [smem:[#allocation2]]
        %v202 = vld [vmem:[%s177] sm:$0xff]
        %v203 = vld [vmem:[%s177 + $0x8] sm:$0xff]
        %v204 = vstv %s201
        %v205 = vmul.f32 %v204, %v202
        %v206 = vmul.f32 %v204, %v203
        %s207 = sld [smem:[#allocation2 + $0x1]]
        %s208 = scalar_lea.vmem %s177, 16 [#allocation6]
        %v209 = vld [vmem:[%s208] sm:$0xff]
        %v210 = vld [vmem:[%s208 + $0x8] sm:$0xff]
        %v211 = vstv %s207
        %v212 = vmul.f32 %v211, %v209
        %v213 = vmul.f32 %v211, %v210
        %v214 = vadd.f32 %v205, %v212
        %v215 = vadd.f32 %v206, %v213
        %s216 = sld [smem:[#allocation2 + $0x2]]
        %s217 = scalar_lea.vmem %s177, 32 [#allocation6]
        %v218 = vld [vmem:[%s217] sm:$0xff]
        %v219 = vld [vmem:[%s217 + $0x8] sm:$0xff]
        %v220 = vstv %s216
        %v221 = vmul.f32 %v220, %v218
        %v222 = vmul.f32 %v220, %v219
        %v223 = vadd.f32 %v214, %v221
        %v224 = vadd.f32 %v215, %v222
        %s225 = sld [smem:[#allocation2 + $0x3]]
        %s226 = scalar_lea.vmem %s177, 48 [#allocation6]
        %v227 = vld [vmem:[%s226] sm:$0xff]
        %v228 = vld [vmem:[%s226 + $0x8] sm:$0xff]
        %v229 = vstv %s225
        %v230 = vmul.f32 %v229, %v227
        %v231 = vmul.f32 %v229, %v228
        %v232 = vadd.f32 %v223, %v230
        %v233 = vadd.f32 %v224, %v231
        %234 = vst [vmem:[%s198] sm:$0xff] %v232
        %235 = vst [vmem:[%s198 + $0x8] sm:$0xff] %v233
        %s236 = sand.u32 %s75, 1
        %s237 = scalar_lea.sflag [#allocation4], %s236
        %s238 = sand.u32 %s75, 1
        %s239 = smul.addr %s238, 16
        %s240 = scalar_lea.vmem [#allocation7], %s239
        // Predicated region
        $region37: #{tpu_custom_call.1} parent=27 // pred_check
          %p241 = pneg %p85
        $region38: #{tpu_custom_call.1} parent=27 // pred_check_branch
          %243 = sbr.rel (%p241) target = $region40
        $region39: #{tpu_custom_call.1} parent=27 // pred_region
          %s244 = smul.u32 2, %s20
          %s246 = ssub.s32 256, 256
          %247 = vsyncadd %s237, %s246
          %s248 = smul.addr %s244, 128
          %s249 = scalar_lea.hbm %s2, %s248
          %s250 = sshll.u32 %s240, 4
          %s251 = int_to_ptr.vmem [resolvable:$true] %s250
          %256 = dma.vmem_to_hbm [thread:$0]  %s251, 256, %s249, %s237, 128, 128, 8
        $region40: #{tpu_custom_call.1} parent=27 // pred_fallthru
          _
      $region28: #{tpu_custom_call.1} parent=5 // pred_fallthru
        _
      %p257 = scmp.le.s32.totalorder 2, %s15
      // Predicated region
      $region41: #{tpu_custom_call.1} parent=5 // pred_check
        %p258 = pneg %p257
      $region42: #{tpu_custom_call.1} parent=5 // pred_check_branch
        %260 = sbr.rel (%p258) target = $region44
      $region43: #{tpu_custom_call.1} parent=5 // pred_region
        %s261 = ssub.s32 %s15, 2
        // Predicated region
        $region45: #{tpu_custom_call.1} parent=43 // pred_check
          %p262 = pneg %p91
        $region46: #{tpu_custom_call.1} parent=43 // pred_check_branch
          %264 = sbr.rel (%p262) target = $region48
        $region47: #{tpu_custom_call.1} parent=43 // pred_region
          %s265 = sand.u32 %s76, 1
          %s266 = scalar_lea.sflag [#allocation4], %s265
          %s267 = sand.u32 %s76, 1
          %s268 = smul.addr %s267, 16
          %s269 = scalar_lea.vmem [#allocation7], %s268
          %270 = dma.done %s266, 256
        $region48: #{tpu_custom_call.1} parent=43 // pred_fallthru
          _
      $region44: #{tpu_custom_call.1} parent=5 // pred_fallthru
        _
    $region6: #{tpu_custom_call.1} parent=1 // loop_footer
      %s19 = sadd.s32 1, %s15
    $region7: #{tpu_custom_call.1} parent=1 // loop_footer_branch
      %14 = sbr.rel target = $region3
    $region8: #{tpu_custom_call.1} parent=1 // loop_exit
      _
    %271 = vsyncpa [#allocation3], 1
    %s272 = scalar_lea.sflag [#allocation3], 1
    %273 = vsyncpa %s272, 1
    %274 = vsyncpa [#allocation4], 1
    %s275 = scalar_lea.sflag [#allocation4], 1
    %276 = vsyncpa %s275, 1
    %277 = vsyncpa [#allocation5], 1
    %s278 = scalar_lea.sflag [#allocation5], 1
    %279 = vsyncpa %s278, 1

</llo_original>
